<compile_context>
chip_gen: v7x
topology: tpu7x:2x2x1
jax: 0.10.0
libtpu: 0.0.40
codegen_flags: <defaults>
</compile_context>

<pallas_src>
import jax
import jax.numpy as jnp
from jax import lax
from jax.experimental import pallas as pl
from jax.experimental.pallas import tpu as pltpu


def transpose_linear_kernel(x_ref, w_ref, b_ref, o_ref, acc_ref):
    # x_ref:   (tK, tS)  one (C, S) tile of one batch (batch dim squeezed)
    # w_ref:   (tK, tO)  Linear weight tile
    # b_ref:   (1, tO)   bias tile (f32)
    # o_ref:   (tS, tO)  output tile (batch dim squeezed)
    # acc_ref: (tS, tO)  f32 accumulator, resident across the K grid axis
    k = pl.program_id(3)

    @pl.when(k == 0)
    def _init():
        acc_ref[...] = jnp.zeros_like(acc_ref)

    x = x_ref[...]
    w = w_ref[...]
    if x.dtype != w.dtype:
        # Match the (narrower) weight dtype so the MXU runs at bf16 rate
        # while still accumulating in f32 below.
        x = x.astype(w.dtype)

    # swapaxes(1, 2) + Linear(C, O): contract dim 0 of the (C, S) tile with
    # dim 0 of W -> (tS, tO).  The transpose is folded into the MXU
    # contraction; no explicit transpose of the activation tile is requested.
    acc_ref[...] += lax.dot_general(
        x, w,
        dimension_numbers=(((0,), (0,)), ((), ())),
        preferred_element_type=jnp.float32,
    )

    @pl.when(k == pl.num_programs(3) - 1)
    def _finalize():
        o_ref[...] = (acc_ref[...] + b_ref[...]).astype(o_ref.dtype)


def _largest_tile(dim, granule, cap):
    """Largest multiple-of-`granule` divisor of `dim` that is <= cap (or None)."""
    if dim % granule != 0:
        return None
    best = None
    for t in range(granule, min(dim, cap) + 1, granule):
        if dim % t == 0:
            best = t
    return best


def transpose_model(x, w, b, *, max_tile=512):
    """Pallas TransposeModel(nn.Linear(C, O)): swapaxes(x, 1, 2) @ w + b.

    x: (B, C, S); w: (C, O); b: (O,).  Returns (B, S, O) in x.dtype.
    """
    B, C, S = x.shape
    C_w, O = w.shape
    assert C_w == C, (C_w, C)

    # Tile sizes.  Last-two-dim blocks must be (8, 128)-granular or full-dim.
    tS = _largest_tile(S, 128, max_tile) or S   # lane dim of x / sublane of out
    tK = _largest_tile(C, 128, max_tile) or C   # contraction (sublane) dim
    tO = _largest_tile(O, 128, max_tile) or O   # lane dim of w / out
    # TODO(synk): a very large O that is not a multiple of 128 falls back to a
    # single full-width (masked-store) O block; pre-pad O at parameter setup
    # time if that shape ever dominates.

    nS, nO, nK = S // tS, O // tO, C // tK
    b2 = b.reshape(1, O).astype(jnp.float32)   # f32 epilogue bias

    return pl.pallas_call(
        transpose_linear_kernel,
        out_shape=jax.ShapeDtypeStruct((B, S, O), x.dtype),
        grid_spec=pltpu.PrefetchScalarGridSpec(
            num_scalar_prefetch=0,
            grid=(B, nS, nO, nK),   # contraction axis last (innermost)
            in_specs=[
                # Batch dim squeezed (None): the kernel sees clean 2-D tiles.
                pl.BlockSpec((None, tK, tS), lambda bi, si, oi, ki: (bi, ki, si)),
                pl.BlockSpec((tK, tO), lambda bi, si, oi, ki: (ki, oi)),
                pl.BlockSpec((1, tO), lambda bi, si, oi, ki: (0, oi)),
            ],
            out_specs=pl.BlockSpec((None, tS, tO),
                                   lambda bi, si, oi, ki: (bi, si, oi)),
            scratch_shapes=[pltpu.VMEM((tS, tO), jnp.float32)],
        ),
        compiler_params=pltpu.CompilerParams(
            # B / S / O tiles are independent (megacore-shardable on v7x); the
            # C contraction axis carries the accumulator and must stay ordered.
            dimension_semantics=("parallel", "parallel", "parallel", "arbitrary"),
            # A few MiB of double-buffered tiles at the default caps; 32 MiB
            # raises v5e's 16 MiB scoped default and stays well inside v7x's
            # 64 MiB physical VMEM.
            vmem_limit_bytes=32 * 1024 * 1024,
        ),
    )(x, w, b2)


if __name__ == "__main__":
    key = jax.random.PRNGKey(0)
    kx, kw, kb = jax.random.split(key, 3)

    # Small but MXU-friendly shapes: S=128 keeps the matmul M dimension filled
    # and O=128 needs no padding or masked-lane stores.
    B, C, S, O = 2, 64, 128, 128

    x = jax.random.normal(kx, (B, C, S), dtype=jnp.float32)
    # Deterministic synthetic inner nn.Linear(C, O) parameters.
    w = jax.random.normal(kw, (C, O), dtype=jnp.float32) * 0.05
    b = jax.random.normal(kb, (O,), dtype=jnp.float32) * 0.05

    out = jax.block_until_ready(transpose_model(x, w, b))

    # Reference: pure-JAX equivalent of model(x.swapaxes(1, 2)); force a true
    # f32 matmul so the comparison is not polluted by XLA's default precision.
    ref = jnp.matmul(jnp.swapaxes(x, 1, 2), w,
                     precision=lax.Precision.HIGHEST) + b
    assert out.shape == (B, S, O)
    assert jnp.allclose(out, ref, atol=1e-4, rtol=1e-4), float(
        jnp.max(jnp.abs(out - ref)))

    print("KERNEL_OK")
</pallas_src>

<mosaic_0001>
module attributes {stable_mosaic.version = 11 : i64} {
  func.func @transpose_linear_kernel(%arg0: i32, %arg1: i32, %arg2: i32, %arg3: i32, %arg4: memref<1x64x128xf32, #tpu.memory_space<vmem>>, %arg5: memref<64x128xf32, #tpu.memory_space<vmem>>, %arg6: memref<1x128xf32, #tpu.memory_space<vmem>>, %arg7: memref<1x128x128xf32, #tpu.memory_space<vmem>>, %arg8: memref<128x128xf32, #tpu.memory_space<vmem>>) attributes {dimension_semantics = [#tpu.dimension_semantics<parallel>, #tpu.dimension_semantics<parallel>, #tpu.dimension_semantics<parallel>, #tpu.dimension_semantics<arbitrary>], iteration_bounds = array<i64: 2, 1, 1, 1>, scalar_prefetch = 0 : i64, scratch_operands = 1 : i64, tpu.core_type = #tpu.core_type<tc>, window_params = [{transform_indices = @transform_0, window_bounds = array<i64: 1, 64, 128>}, {transform_indices = @transform_1, window_bounds = array<i64: 64, 128>}, {transform_indices = @transform_2, window_bounds = array<i64: 1, 128>}, {transform_indices = @transform_3, window_bounds = array<i64: 1, 128, 128>}]} {
    %c0_i32 = arith.constant 0 : i32
    %0 = arith.cmpi eq, %arg3, %c0_i32 : i32
    %1 = arith.extui %0 : i1 to i32
    %c0_i32_0 = arith.constant 0 : i32
    %2 = arith.cmpi ne, %1, %c0_i32_0 : i32
    scf.if %2 {
      %cst_11 = arith.constant 0.000000e+00 : f32
      %13 = vector.broadcast %cst_11 : f32 to vector<128x128xf32>
      %c0_12 = arith.constant 0 : index
      %c0_13 = arith.constant 0 : index
      %14 = vector.load %arg8[%c0_12, %c0_13] : memref<128x128xf32, #tpu.memory_space<vmem>>, vector<128x128xf32>
      tpu.vector_store %arg8[%c0_12, %c0_13], %13 {strides = array<i32>} : memref<128x128xf32, #tpu.memory_space<vmem>>, vector<128x128xf32>,
    } else {
    }
    %c0 = arith.constant 0 : index
    %c0_1 = arith.constant 0 : index
    %c0_2 = arith.constant 0 : index
    %3 = vector.load %arg4[%c0, %c0_1, %c0_2] : memref<1x64x128xf32, #tpu.memory_space<vmem>>, vector<1x64x128xf32>
    %4 = vector.shape_cast %3 : vector<1x64x128xf32> to vector<64x128xf32>
    %c0_3 = arith.constant 0 : index
    %c0_4 = arith.constant 0 : index
    %5 = vector.load %arg5[%c0_3, %c0_4] : memref<64x128xf32, #tpu.memory_space<vmem>>, vector<64x128xf32>
    %c0_5 = arith.constant 0 : index
    %c0_6 = arith.constant 0 : index
    %6 = vector.load %arg8[%c0_5, %c0_6] : memref<128x128xf32, #tpu.memory_space<vmem>>, vector<128x128xf32>
    %cst = arith.constant dense<0.000000e+00> : vector<128x128xf32>
    %7 = tpu.matmul %4, %5, %cst {dimension_numbers = #tpu.dot_dimension_numbers<[0], [0], [1], [1], [0, 1, 1, 1], [], []>} : vector<64x128xf32>, vector<64x128xf32>, vector<128x128xf32> -> vector<128x128xf32>
    %8 = arith.addf %6, %7 : vector<128x128xf32>
    %c0_7 = arith.constant 0 : index
    %c0_8 = arith.constant 0 : index
    %9 = vector.load %arg8[%c0_7, %c0_8] : memref<128x128xf32, #tpu.memory_space<vmem>>, vector<128x128xf32>
    tpu.vector_store %arg8[%c0_7, %c0_8], %8 {strides = array<i32>} : memref<128x128xf32, #tpu.memory_space<vmem>>, vector<128x128xf32>,
    %c0_i32_9 = arith.constant 0 : i32
    %10 = arith.cmpi eq, %arg3, %c0_i32_9 : i32
    %11 = arith.extui %10 : i1 to i32
    %c0_i32_10 = arith.constant 0 : i32
    %12 = arith.cmpi ne, %11, %c0_i32_10 : i32
    scf.if %12 {
      %c0_11 = arith.constant 0 : index
      %c0_12 = arith.constant 0 : index
      %13 = vector.load %arg8[%c0_11, %c0_12] : memref<128x128xf32, #tpu.memory_space<vmem>>, vector<128x128xf32>
      %c0_13 = arith.constant 0 : index
      %c0_14 = arith.constant 0 : index
      %14 = vector.load %arg6[%c0_13, %c0_14] : memref<1x128xf32, #tpu.memory_space<vmem>>, vector<1x128xf32>
      %15 = vector.broadcast %14 : vector<1x128xf32> to vector<128x128xf32>
      %16 = arith.addf %13, %15 : vector<128x128xf32>
      %c0_15 = arith.constant 0 : index
      %c0_16 = arith.constant 0 : index
      %c0_17 = arith.constant 0 : index
      %17 = vector.load %arg7[%c0_15, %c0_16, %c0_17] : memref<1x128x128xf32, #tpu.memory_space<vmem>>, vector<1x128x128xf32>
      %18 = vector.shape_cast %17 : vector<1x128x128xf32> to vector<128x128xf32>
      %19 = vector.shape_cast %16 : vector<128x128xf32> to vector<1x128x128xf32>
      tpu.vector_store %arg7[%c0_15, %c0_16, %c0_17], %19 {strides = array<i32>} : memref<1x128x128xf32, #tpu.memory_space<vmem>>, vector<1x128x128xf32>,
    } else {
    }
    return
  }
  func.func @transform_0(%arg0: i32, %arg1: i32, %arg2: i32, %arg3: i32) -> (i32, i32, i32) {
    %c0_i32 = arith.constant 0 : i32
    return %arg0, %arg3, %arg1 : i32, i32, i32
  }
  func.func @transform_1(%arg0: i32, %arg1: i32, %arg2: i32, %arg3: i32) -> (i32, i32) {
    %c0_i32 = arith.constant 0 : i32
    return %arg3, %arg2 : i32, i32
  }
  func.func @transform_2(%arg0: i32, %arg1: i32, %arg2: i32, %arg3: i32) -> (i32, i32) {
    %c0_i32 = arith.constant 0 : i32
    %c0_i32_0 = arith.constant 0 : i32
    return %c0_i32, %arg2 : i32, i32
  }
  func.func @transform_3(%arg0: i32, %arg1: i32, %arg2: i32, %arg3: i32) -> (i32, i32, i32) {
    %c0_i32 = arith.constant 0 : i32
    return %arg0, %arg1, %arg2 : i32, i32, i32
  }
}

</mosaic_0001>

<llo_original>
// kernel: tpu_custom_call.1
$region0: #{tpu_custom_call.1}
  #allocation0 [shape = 'u32[]', space=smem, size = 0x4, offset = 0x4, fixed_abs, tag = 'smem constant byte address 0x4 - core index']
  #allocation1 [shape = 'u32[144,128]{1,0:T(1,128)}', space=vmem, size = 0x12000, scoped, tag = 'internal scratch']
  #allocation2 [shape = 'f32[128,128]{1,0:T(8,128)}', space=vmem, size = 0x10000, scoped, tag = 'scratch operand']
  %s0 = inlined_call_operand.hbm [shape: f32[2,64,128], index: 0, kind: input, shape index: {}]
  %s1 = inlined_call_operand.hbm [shape: f32[64,128], index: 1, kind: input, shape index: {}]
  %s2 = inlined_call_operand.vmem [shape: f32[1,128], index: 2, kind: input, shape index: {}]
  %s3 = inlined_call_operand.hbm [shape: f32[2,128,128], index: 3, kind: output, shape index: {}]
  %s4 = sld [smem:[#allocation0]]
  $region61: #{tpu_custom_call.1} parent=0
    _
  %s6 = ssub.s32 1, %s4
  %s7 = scalar_select 0, %s6, %s4
  $region1: #{tpu_custom_call.1} parent=0
    #allocation3 [shape = 'u8[65536]{0}', space=vmem, size = 0x10000, scoped, tag = 'input window, operand 0']
    #allocation4 [shape = 's32[2]{0}', space=sflag, size = 0x8, scoped, tag = 'scoped memory for tpu_custom_call.1']
    #allocation5 [shape = 's32[2]{0}', space=sflag, size = 0x8, scoped, tag = 'scoped memory for tpu_custom_call.1']
    #allocation6 [shape = 'u8[32768]{0}', space=vmem, size = 0x8000, scoped, tag = 'input window, operand 1, single buffered']
    #allocation7 [shape = 's32[1]{0}', space=sflag, size = 0x4, scoped, tag = 'scoped memory for tpu_custom_call.1']
    #allocation8 [shape = 'u8[131072]{0}', space=vmem, size = 0x20000, scoped, tag = 'output window, operand 0']
    %8 = vsyncpa [#allocation4], 0
    %s9 = scalar_lea.sflag [#allocation4], 1
    %10 = vsyncpa %s9, 0
    %11 = vsyncpa [#allocation7], 0
    %12 = vsyncpa [#allocation5], 0
    %s13 = scalar_lea.sflag [#allocation5], 1
    %14 = vsyncpa %s13, 0
    loop: start=0, step=1, limit=4
    $region2: #{tpu_custom_call.1} parent=1 // loop_pre_header
      _
    $region3: #{tpu_custom_call.1} parent=1 // loop_header
      %s16 = sphi 0, %s20
      %p17 = scmp.ge.s32.totalorder %s16, 4
      %s23 = sphi 0, %s49
      %s24 = sphi 0, %s45
      %s25 = sphi 0, %s41
      %s26 = sphi 0, %s37
      %s27 = sphi 0, %s23
      %s28 = sphi 0, %s24
      %s29 = sphi 0, %s25
      %s30 = sphi 0, %s26
      %s31 = sphi 0, %s27
      %s32 = sphi 0, %s28
      %s33 = sphi 0, %s29
      %s34 = sphi 0, %s30
      %s56 = sphi 0, %s58
      %s59 = sphi 0, %s56
      %s60 = sphi 0, %s59
      %s76 = sphi 0, %s60
      %s84 = sphi 0, %s86
      %s87 = sphi 0, %s84
      %s88 = sphi 0, %s87
      %s104 = sphi 0, %s88
      %s110 = sphi 0, %s112
      %s113 = sphi 0, %s110
      %s114 = sphi 0, %s113
      %s130 = sphi 0, %s114
      %s140 = sphi 0, %s142
      %s143 = sphi 0, %s140
      %s144 = sphi 0, %s143
      %s160 = sphi 0, %s144
    $region4: #{tpu_custom_call.1} parent=1 // loop_header_branch
      %19 = sbr.rel (%p17) target = $region8
    $region5: #{tpu_custom_call.1} parent=1 // loop_body
      %s21 = ssub.s32 %s16, 1
      %s22 = ssub.s32 %s16, 2
      %s35 = sadd.s32 1, %s26
      %p36 = scmp.ge.s32.totalorder %s35, 1
      %s37 = scalar_select %p36, 0, %s35
      %s38 = sadd.s32 1, %s25
      %s39 = scalar_select %p36, %s38, %s25
      %p40 = scmp.ge.s32.totalorder %s39, 1
      %s41 = scalar_select %p40, 0, %s39
      %s42 = sadd.s32 1, %s24
      %s43 = scalar_select %p40, %s42, %s24
      %p44 = scmp.ge.s32.totalorder %s43, 1
      %s45 = scalar_select %p44, 0, %s43
      %s46 = sadd.s32 1, %s23
      %s47 = scalar_select %p44, %s46, %s23
      %p48 = scmp.ge.s32.totalorder %s47, 2
      %s49 = scalar_select %p48, 0, %s47
      %s50 = ssub.s32 %s23, %s49
      %s51 = ssub.s32 %s26, %s37
      %s52 = sor.u32 %s50, %s51
      %s53 = ssub.s32 %s24, %s45
      %s54 = sor.u32 %s52, %s53
      %p55 = scmp.eq.s32.totalorder %s54, 0
      %s57 = sadd.s32 %s56, 1
      %s58 = scalar_select %p55, %s56, %s57
      %p61 = pneg %p55
      %p62 = scmp.eq.s32.totalorder %s16, 1
      %p63 = por %p61, %p62
      %p64 = scmp.ne.s32.totalorder %s56, %s59
      %p65 = scmp.eq.s32.totalorder %s16, 0
      %p66 = por %p64, %p65
      %p67 = scmp.ne.s32.totalorder %s56, %s59
      %p68 = scmp.eq.s32.totalorder %s21, 1
      %p69 = por %p67, %p68
      %p70 = scmp.ne.s32.totalorder %s59, %s60
      %p71 = scmp.eq.s32.totalorder %s21, 0
      %p72 = por %p70, %p71
      %p73 = scmp.ne.s32.totalorder %s59, %s60
      %p74 = scmp.eq.s32.totalorder %s22, 1
      %p75 = por %p73, %p74
      %p77 = scmp.ne.s32.totalorder %s60, %s76
      %p78 = scmp.eq.s32.totalorder %s22, 0
      %p79 = por %p77, %p78
      %s80 = ssub.s32 %s26, %s37
      %s81 = ssub.s32 %s25, %s41
      %s82 = sor.u32 %s80, %s81
      %p83 = scmp.eq.s32.totalorder %s82, 0
      %s85 = sadd.s32 %s84, 1
      %s86 = scalar_select %p83, %s84, %s85
      %p89 = pneg %p83
      %p90 = scmp.eq.s32.totalorder %s16, 1
      %p91 = por %p89, %p90
      %p92 = scmp.ne.s32.totalorder %s84, %s87
      %p93 = scmp.eq.s32.totalorder %s16, 0
      %p94 = por %p92, %p93
      %p95 = scmp.ne.s32.totalorder %s84, %s87
      %p96 = scmp.eq.s32.totalorder %s21, 1
      %p97 = por %p95, %p96
      %p98 = scmp.ne.s32.totalorder %s87, %s88
      %p99 = scmp.eq.s32.totalorder %s21, 0
      %p100 = por %p98, %p99
      %p101 = scmp.ne.s32.totalorder %s87, %s88
      %p102 = scmp.eq.s32.totalorder %s22, 1
      %p103 = por %p101, %p102
      %p105 = scmp.ne.s32.totalorder %s88, %s104
      %p106 = scmp.eq.s32.totalorder %s22, 0
      %p107 = por %p105, %p106
      %s108 = ssub.s32 %s25, %s41
      %p109 = scmp.eq.s32.totalorder %s108, 0
      %s111 = sadd.s32 %s110, 1
      %s112 = scalar_select %p109, %s110, %s111
      %p115 = pneg %p109
      %p116 = scmp.eq.s32.totalorder %s16, 1
      %p117 = por %p115, %p116
      %p118 = scmp.ne.s32.totalorder %s110, %s113
      %p119 = scmp.eq.s32.totalorder %s16, 0
      %p120 = por %p118, %p119
      %p121 = scmp.ne.s32.totalorder %s110, %s113
      %p122 = scmp.eq.s32.totalorder %s21, 1
      %p123 = por %p121, %p122
      %p124 = scmp.ne.s32.totalorder %s113, %s114
      %p125 = scmp.eq.s32.totalorder %s21, 0
      %p126 = por %p124, %p125
      %p127 = scmp.ne.s32.totalorder %s113, %s114
      %p128 = scmp.eq.s32.totalorder %s22, 1
      %p129 = por %p127, %p128
      %p131 = scmp.ne.s32.totalorder %s114, %s130
      %p132 = scmp.eq.s32.totalorder %s22, 0
      %p133 = por %p131, %p132
      %s134 = ssub.s32 %s23, %s49
      %s135 = ssub.s32 %s24, %s45
      %s136 = sor.u32 %s134, %s135
      %s137 = ssub.s32 %s25, %s41
      %s138 = sor.u32 %s136, %s137
      %p139 = scmp.eq.s32.totalorder %s138, 0
      %s141 = sadd.s32 %s140, 1
      %s142 = scalar_select %p139, %s140, %s141
      %p145 = pneg %p139
      %p146 = scmp.eq.s32.totalorder %s16, 1
      %p147 = por %p145, %p146
      %p148 = scmp.ne.s32.totalorder %s140, %s143
      %p149 = scmp.eq.s32.totalorder %s16, 0
      %p150 = por %p148, %p149
      %p151 = scmp.ne.s32.totalorder %s140, %s143
      %p152 = scmp.eq.s32.totalorder %s21, 1
      %p153 = por %p151, %p152
      %p154 = scmp.ne.s32.totalorder %s143, %s144
      %p155 = scmp.eq.s32.totalorder %s21, 0
      %p156 = por %p154, %p155
      %p157 = scmp.ne.s32.totalorder %s143, %s144
      %p158 = scmp.eq.s32.totalorder %s22, 1
      %p159 = por %p157, %p158
      %p161 = scmp.ne.s32.totalorder %s144, %s160
      %p162 = scmp.eq.s32.totalorder %s22, 0
      %p163 = por %p161, %p162
      %p164 = scmp.le.s32.totalorder 1, %s16
      %p165 = scmp.lt.s32.totalorder %s16, 3
      %p166 = pnand %p164, %p165
      %p167 = pneg %p166
      // Predicated region
      $region9: #{tpu_custom_call.1} parent=5 // pred_check
        _
      $region10: #{tpu_custom_call.1} parent=5 // pred_check_branch
        %169 = sbr.rel (%p166) target = $region12
      $region11: #{tpu_custom_call.1} parent=5 // pred_region
        %s170 = ssub.s32 %s16, 1
        // Predicated region
        $region13: #{tpu_custom_call.1} parent=11 // pred_check
          %p171 = pneg %p100
        $region14: #{tpu_custom_call.1} parent=11 // pred_check_branch
          %173 = sbr.rel (%p171) target = $region16
        $region15: #{tpu_custom_call.1} parent=11 // pred_region
          %s174 = smul.u32 8, %s30
          %s176 = ssub.s32 1024, 1024
          %177 = vsyncadd [#allocation7], %s176
          %s178 = sadd.s32 %s29, %s174
          %s179 = smul.addr %s178, 128
          %s180 = scalar_lea.hbm %s1, %s179
          %s181 = sshll.u32 [#allocation6], 4
          %s182 = int_to_ptr.vmem [resolvable:$true] %s181
          %187 = dma.hbm_to_vmem [thread:$0]  %s180, 1024, %s182, [#allocation7], 128, 128, 8
        $region16: #{tpu_custom_call.1} parent=11 // pred_fallthru
          _
        // Predicated region
        $region17: #{tpu_custom_call.1} parent=11 // pred_check
          %p188 = pneg %p126
        $region18: #{tpu_custom_call.1} parent=11 // pred_check_branch
          %190 = sbr.rel (%p188) target = $region20
        $region19: #{tpu_custom_call.1} parent=11 // pred_region
          %p191 = scmp.lt.s32.totalorder %s29, 0
          %s192 = scalar_select %p191, %s29, 0
          %s193 = scalar_lea.vmem %s2, %s192
        $region20: #{tpu_custom_call.1} parent=11 // pred_fallthru
          _
      $region12: #{tpu_custom_call.1} parent=5 // pred_fallthru
        _
      %p194 = scmp.lt.s32.totalorder %s16, 2
      // Predicated region
      $region21: #{tpu_custom_call.1} parent=5 // pred_check
        %p195 = pneg %p194
      $region22: #{tpu_custom_call.1} parent=5 // pred_check_branch
        %197 = sbr.rel (%p195) target = $region24
      $region23: #{tpu_custom_call.1} parent=5 // pred_region
        // Predicated region
        $region25: #{tpu_custom_call.1} parent=23 // pred_check
          %p198 = pneg %p66
        $region26: #{tpu_custom_call.1} parent=23 // pred_check_branch
          %200 = sbr.rel (%p198) target = $region28
        $region27: #{tpu_custom_call.1} parent=23 // pred_region
          %s201 = sand.u32 %s56, 1
          %s202 = scalar_lea.sflag [#allocation4], %s201
          %s203 = sand.u32 %s56, 1
          %s204 = smul.addr %s203, 64
          %s205 = scalar_lea.vmem [#allocation3], %s204
          %s206 = smul.u32 8, %s26
          %s208 = ssub.s32 1024, 1024
          %209 = vsyncadd %s202, %s208
          %s210 = sadd.s32 %s24, %s206
          %s211 = smul.addr %s23, 8
          %s212 = sadd.s32 %s210, %s211
          %s213 = smul.addr %s212, 128
          %s214 = scalar_lea.hbm %s0, %s213
          %s215 = sshll.u32 %s205, 4
          %s216 = int_to_ptr.vmem [resolvable:$true] %s215
          %221 = dma.hbm_to_vmem [thread:$0]  %s214, 1024, %s216, %s202, 128, 128, 8
        $region28: #{tpu_custom_call.1} parent=23 // pred_fallthru
          _
      $region24: #{tpu_custom_call.1} parent=5 // pred_fallthru
        _
      %p222 = scmp.le.s32.totalorder 1, %s16
      %p223 = scmp.lt.s32.totalorder %s16, 3
      %p224 = pnand %p222, %p223
      %p225 = pneg %p224
      // Predicated region
      $region29: #{tpu_custom_call.1} parent=5 // pred_check
        _
      $region30: #{tpu_custom_call.1} parent=5 // pred_check_branch
        %227 = sbr.rel (%p224) target = $region32
      $region31: #{tpu_custom_call.1} parent=5 // pred_region
        %s228 = ssub.s32 %s16, 1
        %s229 = sand.u32 %s59, 1
        %s230 = scalar_lea.sflag [#allocation4], %s229
        %s231 = sand.u32 %s59, 1
        %s232 = smul.addr %s231, 64
        %s233 = scalar_lea.vmem [#allocation3], %s232
        // Predicated region
        $region33: #{tpu_custom_call.1} parent=31 // pred_check
          %p234 = pneg %p72
        $region34: #{tpu_custom_call.1} parent=31 // pred_check_branch
          %236 = sbr.rel (%p234) target = $region36
        $region35: #{tpu_custom_call.1} parent=31 // pred_region
          %237 = dma.done %s230, 1024
        $region36: #{tpu_custom_call.1} parent=31 // pred_fallthru
          _
        // Predicated region
        $region37: #{tpu_custom_call.1} parent=31 // pred_check
          %p238 = pneg %p100
        $region38: #{tpu_custom_call.1} parent=31 // pred_check_branch
          %240 = sbr.rel (%p238) target = $region40
        $region39: #{tpu_custom_call.1} parent=31 // pred_region
          %241 = dma.done [#allocation7], 1024
        $region40: #{tpu_custom_call.1} parent=31 // pred_fallthru
          _
        %s242 = sand.u32 %s59, 1
        %s243 = scalar_lea.sflag [#allocation4], %s242
        %s244 = sand.u32 %s59, 1
        %s245 = smul.addr %s244, 64
        %s246 = scalar_lea.vmem [#allocation3], %s245
        %p247 = pneg %p72
        %p248 = pneg %p69
        %p249 = pneg %p100
        %p250 = pneg %p97
        %p251 = scmp.lt.s32.totalorder %s29, 0
        %s252 = scalar_select %p251, %s29, 0
        %s253 = scalar_lea.vmem %s2, %s252
        %p254 = pneg %p126
        %p255 = pneg %p123
        %p256 = pneg %p156
        %p257 = pneg %p153
        %s258 = sand.u32 %s143, 1
        %s259 = scalar_lea.sflag [#allocation5], %s258
        %s260 = sand.u32 %s143, 1
        %s261 = smul.addr %s260, 128
        %s262 = scalar_lea.vmem [#allocation8], %s261
        %s263 = smul.u32 8, %s30
        %s264 = smul.u32 8, %s30
        %p265 = scmp.lt.s32.totalorder %s29, 0
        %s266 = scalar_select %p265, %s29, 0
        %s267 = scalar_lea.vmem %s2, %s266
        %s268 = smul.u32 16, %s28
        %p269 = scmp.eq.s32.totalorder %s30, 0
        // Predicated region
        $region41: #{tpu_custom_call.1} parent=31 // pred_check
          %p270 = pneg %p269
        $region42: #{tpu_custom_call.1} parent=31 // pred_check_branch
          %272 = sbr.rel (%p270) target = $region44
        $region43: #{tpu_custom_call.1} parent=31 // pred_region
          %273 = vst [vmem:[#allocation2] sm:$0xff] 0.0
          %274 = vst [vmem:[#allocation2 + $0x8] sm:$0xff] 0.0
          %275 = vst [vmem:[#allocation2 + $0x10] sm:$0xff] 0.0
          %276 = vst [vmem:[#allocation2 + $0x18] sm:$0xff] 0.0
          %277 = vst [vmem:[#allocation2 + $0x20] sm:$0xff] 0.0
          %278 = vst [vmem:[#allocation2 + $0x28] sm:$0xff] 0.0
          %279 = vst [vmem:[#allocation2 + $0x30] sm:$0xff] 0.0
          %280 = vst [vmem:[#allocation2 + $0x38] sm:$0xff] 0.0
          %281 = vst [vmem:[#allocation2 + $0x40] sm:$0xff] 0.0
          %282 = vst [vmem:[#allocation2 + $0x48] sm:$0xff] 0.0
          %283 = vst [vmem:[#allocation2 + $0x50] sm:$0xff] 0.0
          %284 = vst [vmem:[#allocation2 + $0x58] sm:$0xff] 0.0
          %285 = vst [vmem:[#allocation2 + $0x60] sm:$0xff] 0.0
          %286 = vst [vmem:[#allocation2 + $0x68] sm:$0xff] 0.0
          %287 = vst [vmem:[#allocation2 + $0x70] sm:$0xff] 0.0
          %288 = vst [vmem:[#allocation2 + $0x78] sm:$0xff] 0.0
        $region44: #{tpu_custom_call.1} parent=31 // pred_fallthru
          _
        %v289 = vld [vmem:[%s233] sm:$0xff]
        %v290 = vld [vmem:[%s233 + $0x8] sm:$0xff]
        %v291 = vld [vmem:[%s233 + $0x10] sm:$0xff]
        %v292 = vld [vmem:[%s233 + $0x18] sm:$0xff]
        %v293 = vld [vmem:[%s233 + $0x20] sm:$0xff]
        %v294 = vld [vmem:[%s233 + $0x28] sm:$0xff]
        %v295 = vld [vmem:[%s233 + $0x30] sm:$0xff]
        %v296 = vld [vmem:[%s233 + $0x38] sm:$0xff]
        %v297 = vld [vmem:[#allocation6] sm:$0xff]
        %v298 = vld [vmem:[#allocation6 + $0x8] sm:$0xff]
        %v299 = vld [vmem:[#allocation6 + $0x10] sm:$0xff]
        %v300 = vld [vmem:[#allocation6 + $0x18] sm:$0xff]
        %v301 = vld [vmem:[#allocation6 + $0x20] sm:$0xff]
        %v302 = vld [vmem:[#allocation6 + $0x28] sm:$0xff]
        %v303 = vld [vmem:[#allocation6 + $0x30] sm:$0xff]
        %v304 = vld [vmem:[#allocation6 + $0x38] sm:$0xff]
        %v305 = vld [vmem:[#allocation2] sm:$0xff]
        %v306 = vld [vmem:[#allocation2 + $0x8] sm:$0xff]
        %v307 = vld [vmem:[#allocation2 + $0x10] sm:$0xff]
        %v308 = vld [vmem:[#allocation2 + $0x18] sm:$0xff]
        %v309 = vld [vmem:[#allocation2 + $0x20] sm:$0xff]
        %v310 = vld [vmem:[#allocation2 + $0x28] sm:$0xff]
        %v311 = vld [vmem:[#allocation2 + $0x30] sm:$0xff]
        %v312 = vld [vmem:[#allocation2 + $0x38] sm:$0xff]
        %v313 = vld [vmem:[#allocation2 + $0x40] sm:$0xff]
        %v314 = vld [vmem:[#allocation2 + $0x48] sm:$0xff]
        %v315 = vld [vmem:[#allocation2 + $0x50] sm:$0xff]
        %v316 = vld [vmem:[#allocation2 + $0x58] sm:$0xff]
        %v317 = vld [vmem:[#allocation2 + $0x60] sm:$0xff]
        %v318 = vld [vmem:[#allocation2 + $0x68] sm:$0xff]
        %v319 = vld [vmem:[#allocation2 + $0x70] sm:$0xff]
        %v320 = vld [vmem:[#allocation2 + $0x78] sm:$0xff]
        %321 = vxpose.xlu0.b32.start [1/16] %v289, 128
        %322 = vxpose.xlu0.b32.cont [2/16] %v290, 128
        %323 = vxpose.xlu0.b32.cont [3/16] %v291, 128
        %324 = vxpose.xlu0.b32.cont [4/16] %v292, 128
        %325 = vxpose.xlu0.b32.cont [5/16] %v293, 128
        %326 = vxpose.xlu0.b32.cont [6/16] %v294, 128
        %327 = vxpose.xlu0.b32.cont [7/16] %v295, 128
        %328 = vxpose.xlu0.b32.cont [8/16] %v296, 128
        %329 = vxpose.xlu0.b32.cont [9/16] 0.0, 128
        %330 = vxpose.xlu0.b32.cont [10/16] 0.0, 128
        %331 = vxpose.xlu0.b32.cont [11/16] 0.0, 128
        %332 = vxpose.xlu0.b32.cont [12/16] 0.0, 128
        %333 = vxpose.xlu0.b32.cont [13/16] 0.0, 128
        %334 = vxpose.xlu0.b32.cont [14/16] 0.0, 128
        %335 = vxpose.xlu0.b32.cont [15/16] 0.0, 128
        %336 = vxpose.xlu0.b32.end [16/16] 0.0, 128
        %v337 = vpop.trf.xlu0
        %v338 = vpop.trf.xlu0
        %v339 = vpop.trf.xlu0
        %v340 = vpop.trf.xlu0
        %v341 = vpop.trf.xlu0
        %v342 = vpop.trf.xlu0
        %v343 = vpop.trf.xlu0
        %v344 = vpop.trf.xlu0
        %v345 = vpop.trf.xlu0
        %v346 = vpop.trf.xlu0
        %v347 = vpop.trf.xlu0
        %v348 = vpop.trf.xlu0
        %v349 = vpop.trf.xlu0
        %v350 = vpop.trf.xlu0
        %v351 = vpop.trf.xlu0
        %v352 = vpop.trf.xlu0
        %vm353 = vcmask 523264
        %v355 = vsel %vm353, %v337, 0
        %v358 = vsel %vm353, %v338, 0
        %v361 = vsel %vm353, %v339, 0
        %v364 = vsel %vm353, %v340, 0
        %v367 = vsel %vm353, %v341, 0
        %v370 = vsel %vm353, %v342, 0
        %v373 = vsel %vm353, %v343, 0
        %v376 = vsel %vm353, %v344, 0
        %v379 = vsel %vm353, %v345, 0
        %v382 = vsel %vm353, %v346, 0
        %v385 = vsel %vm353, %v347, 0
        %v388 = vsel %vm353, %v348, 0
        %v391 = vsel %vm353, %v349, 0
        %v394 = vsel %vm353, %v350, 0
        %v397 = vsel %vm353, %v351, 0
        %v400 = vsel %vm353, %v352, 0
        %402 = vmatprep.subr.mxu0 0.0
        %403 = vmatpush1.msra.mxu0 %v297
        %404 = vmatprep.subr.mxu0 0.0
        %405 = vmatpush1.msra.mxu0 %v298
        %406 = vmatprep.subr.mxu0 0.0
        %407 = vmatpush1.msra.mxu0 %v299
        %408 = vmatprep.subr.mxu0 0.0
        %409 = vmatpush1.msra.mxu0 %v300
        %410 = vmatprep.subr.mxu0 0.0
        %411 = vmatpush1.msra.mxu0 %v301
        %412 = vmatprep.subr.mxu0 0.0
        %413 = vmatpush1.msra.mxu0 %v302
        %414 = vmatprep.subr.mxu0 0.0
        %415 = vmatpush1.msra.mxu0 %v303
        %416 = vmatprep.subr.mxu0 0.0
        %417 = vmatpush1.msra.mxu0 %v304
        %418 = vmatprep.subr.mxu0 0.0
        %419 = vmatpush1.msra.mxu0 0.0
        %420 = vmatprep.subr.mxu0 0.0
        %421 = vmatpush1.msra.mxu0 0.0
        %422 = vmatprep.subr.mxu0 0.0
        %423 = vmatpush1.msra.mxu0 0.0
        %424 = vmatprep.subr.mxu0 0.0
        %425 = vmatpush1.msra.mxu0 0.0
        %426 = vmatprep.subr.mxu0 0.0
        %427 = vmatpush1.msra.mxu0 0.0
        %428 = vmatprep.subr.mxu0 0.0
        %429 = vmatpush1.msra.mxu0 0.0
        %430 = vmatprep.subr.mxu0 0.0
        %431 = vmatpush1.msra.mxu0 0.0
        %432 = vmatprep.subr.mxu0 0.0
        %433 = vmatpush1.msra.mxu0 0.0
        %434 = vmatprep.subr.mxu0 0.0
        %435 = vmatpush1.msra.mxu0 0.0
        %436 = vmatprep.subr.mxu0 0.0
        %437 = vmatpush1.msra.mxu0 0.0
        %438 = vmatprep.subr.mxu0 0.0
        %439 = vmatpush1.msra.mxu0 0.0
        %440 = vmatprep.subr.mxu0 0.0
        %441 = vmatpush1.msra.mxu0 0.0
        %442 = vmatprep.subr.mxu0 0.0
        %443 = vmatpush1.msra.mxu0 0.0
        %444 = vmatprep.subr.mxu0 0.0
        %445 = vmatpush1.msra.mxu0 0.0
        %446 = vmatprep.subr.mxu0 0.0
        %447 = vmatpush1.msra.mxu0 0.0
        %448 = vmatprep.subr.mxu0 0.0
        %449 = vmatpush1.msra.mxu0 0.0
        %450 = vmatprep.subr.mxu0 0.0
        %451 = vmatpush1.msra.mxu0 0.0
        %452 = vmatprep.subr.mxu0 0.0
        %453 = vmatpush1.msra.mxu0 0.0
        %454 = vmatprep.subr.mxu0 0.0
        %455 = vmatpush1.msra.mxu0 0.0
        %456 = vmatprep.subr.mxu0 0.0
        %457 = vmatpush1.msra.mxu0 0.0
        %458 = vmatprep.subr.mxu0 0.0
        %459 = vmatpush1.msra.mxu0 0.0
        %460 = vmatprep.subr.mxu0 0.0
        %461 = vmatpush1.msra.mxu0 0.0
        %462 = vmatprep.subr.mxu0 0.0
        %463 = vmatpush1.msra.mxu0 0.0
        %464 = vmatprep.subr.mxu0 0.0
        %465 = vmatpush1.msra.mxu0 0.0
        %466 = vmatprep.mubr.f32.mxu0 0.0
        %467 = vmatmul.mubr.f32.gmra.mrb[0].mxu0 %v355
        %v468 = vpop.f32.mrb[0].mxu0
        %v469 = vadd.f32 0.0, %v468
        %v470 = vpop.f32.mrb[0].mxu0
        %471 = vmatprep.mubr.f32.mxu0 0.0
        %472 = vmatmul.mubr.f32.gmra.mrb[0].mxu0 %v358
        %v473 = vpop.f32.mrb[0].mxu0
        %v474 = vadd.f32 0.0, %v473
        %v475 = vpop.f32.mrb[0].mxu0
        %476 = vmatprep.mubr.f32.mxu0 0.0
        %477 = vmatmul.mubr.f32.gmra.mrb[0].mxu0 %v361
        %v478 = vpop.f32.mrb[0].mxu0
        %v479 = vadd.f32 0.0, %v478
        %v480 = vpop.f32.mrb[0].mxu0
        %481 = vmatprep.mubr.f32.mxu0 0.0
        %482 = vmatmul.mubr.f32.gmra.mrb[0].mxu0 %v364
        %v483 = vpop.f32.mrb[0].mxu0
        %v484 = vadd.f32 0.0, %v483
        %v485 = vpop.f32.mrb[0].mxu0
        %486 = vmatprep.mubr.f32.mxu0 0.0
        %487 = vmatmul.mubr.f32.gmra.mrb[0].mxu0 %v367
        %v488 = vpop.f32.mrb[0].mxu0
        %v489 = vadd.f32 0.0, %v488
        %v490 = vpop.f32.mrb[0].mxu0
        %491 = vmatprep.mubr.f32.mxu0 0.0
        %492 = vmatmul.mubr.f32.gmra.mrb[0].mxu0 %v370
        %v493 = vpop.f32.mrb[0].mxu0
        %v494 = vadd.f32 0.0, %v493
        %v495 = vpop.f32.mrb[0].mxu0
        %496 = vmatprep.mubr.f32.mxu0 0.0
        %497 = vmatmul.mubr.f32.gmra.mrb[0].mxu0 %v373
        %v498 = vpop.f32.mrb[0].mxu0
        %v499 = vadd.f32 0.0, %v498
        %v500 = vpop.f32.mrb[0].mxu0
        %501 = vmatprep.mubr.f32.mxu0 0.0
        %502 = vmatmul.mubr.f32.gmra.mrb[0].mxu0 %v376
        %v503 = vpop.f32.mrb[0].mxu0
        %v504 = vadd.f32 0.0, %v503
        %v505 = vpop.f32.mrb[0].mxu0
        %506 = vmatprep.mubr.f32.mxu0 0.0
        %507 = vmatmul.mubr.f32.gmra.mrb[0].mxu0 %v379
        %v508 = vpop.f32.mrb[0].mxu0
        %v509 = vadd.f32 0.0, %v508
        %v510 = vpop.f32.mrb[0].mxu0
        %511 = vmatprep.mubr.f32.mxu0 0.0
        %512 = vmatmul.mubr.f32.gmra.mrb[0].mxu0 %v382
        %v513 = vpop.f32.mrb[0].mxu0
        %v514 = vadd.f32 0.0, %v513
        %v515 = vpop.f32.mrb[0].mxu0
        %516 = vmatprep.mubr.f32.mxu0 0.0
        %517 = vmatmul.mubr.f32.gmra.mrb[0].mxu0 %v385
        %v518 = vpop.f32.mrb[0].mxu0
        %v519 = vadd.f32 0.0, %v518
        %v520 = vpop.f32.mrb[0].mxu0
        %521 = vmatprep.mubr.f32.mxu0 0.0
        %522 = vmatmul.mubr.f32.gmra.mrb[0].mxu0 %v388
        %v523 = vpop.f32.mrb[0].mxu0
        %v524 = vadd.f32 0.0, %v523
        %v525 = vpop.f32.mrb[0].mxu0
        %526 = vmatprep.mubr.f32.mxu0 0.0
        %527 = vmatmul.mubr.f32.gmra.mrb[0].mxu0 %v391
        %v528 = vpop.f32.mrb[0].mxu0
        %v529 = vadd.f32 0.0, %v528
        %v530 = vpop.f32.mrb[0].mxu0
        %531 = vmatprep.mubr.f32.mxu0 0.0
        %532 = vmatmul.mubr.f32.gmra.mrb[0].mxu0 %v394
        %v533 = vpop.f32.mrb[0].mxu0
        %v534 = vadd.f32 0.0, %v533
        %v535 = vpop.f32.mrb[0].mxu0
        %536 = vmatprep.mubr.f32.mxu0 0.0
        %537 = vmatmul.mubr.f32.gmra.mrb[0].mxu0 %v397
        %v538 = vpop.f32.mrb[0].mxu0
        %v539 = vadd.f32 0.0, %v538
        %v540 = vpop.f32.mrb[0].mxu0
        %541 = vmatprep.mubr.f32.mxu0 0.0
        %542 = vmatmul.mubr.f32.gmra.mrb[0].mxu0 %v400
        %v543 = vpop.f32.mrb[0].mxu0
        %v544 = vadd.f32 0.0, %v543
        %v545 = vpop.f32.mrb[0].mxu0
        %546 = vdwg.mxu0
        %v547 = vadd.f32 %v305, %v469
        %v548 = vadd.f32 %v306, %v474
        %v549 = vadd.f32 %v307, %v479
        %v550 = vadd.f32 %v308, %v484
        %v551 = vadd.f32 %v309, %v489
        %v552 = vadd.f32 %v310, %v494
        %v553 = vadd.f32 %v311, %v499
        %v554 = vadd.f32 %v312, %v504
        %v555 = vadd.f32 %v313, %v509
        %v556 = vadd.f32 %v314, %v514
        %v557 = vadd.f32 %v315, %v519
        %v558 = vadd.f32 %v316, %v524
        %v559 = vadd.f32 %v317, %v529
        %v560 = vadd.f32 %v318, %v534
        %v561 = vadd.f32 %v319, %v539
        %v562 = vadd.f32 %v320, %v544
        %563 = vst [vmem:[#allocation2] sm:$0xff] %v547
        %564 = vst [vmem:[#allocation2 + $0x8] sm:$0xff] %v548
        %565 = vst [vmem:[#allocation2 + $0x10] sm:$0xff] %v549
        %566 = vst [vmem:[#allocation2 + $0x18] sm:$0xff] %v550
        %567 = vst [vmem:[#allocation2 + $0x20] sm:$0xff] %v551
        %568 = vst [vmem:[#allocation2 + $0x28] sm:$0xff] %v552
        %569 = vst [vmem:[#allocation2 + $0x30] sm:$0xff] %v553
        %570 = vst [vmem:[#allocation2 + $0x38] sm:$0xff] %v554
        %571 = vst [vmem:[#allocation2 + $0x40] sm:$0xff] %v555
        %572 = vst [vmem:[#allocation2 + $0x48] sm:$0xff] %v556
        %573 = vst [vmem:[#allocation2 + $0x50] sm:$0xff] %v557
        %574 = vst [vmem:[#allocation2 + $0x58] sm:$0xff] %v558
        %575 = vst [vmem:[#allocation2 + $0x60] sm:$0xff] %v559
        %576 = vst [vmem:[#allocation2 + $0x68] sm:$0xff] %v560
        %577 = vst [vmem:[#allocation2 + $0x70] sm:$0xff] %v561
        %578 = vst [vmem:[#allocation2 + $0x78] sm:$0xff] %v562
        // Predicated region
        $region45: #{tpu_custom_call.1} parent=31 // pred_check
          %p579 = pneg %p269
        $region46: #{tpu_custom_call.1} parent=31 // pred_check_branch
          %581 = sbr.rel (%p579) target = $region48
        $region47: #{tpu_custom_call.1} parent=31 // pred_region
          %v582 = vld [vmem:[#allocation2] sm:$0xff]
          %v583 = vld [vmem:[#allocation2 + $0x8] sm:$0xff]
          %v584 = vld [vmem:[#allocation2 + $0x10] sm:$0xff]
          %v585 = vld [vmem:[#allocation2 + $0x18] sm:$0xff]
          %v586 = vld [vmem:[#allocation2 + $0x20] sm:$0xff]
          %v587 = vld [vmem:[#allocation2 + $0x28] sm:$0xff]
          %v588 = vld [vmem:[#allocation2 + $0x30] sm:$0xff]
          %v589 = vld [vmem:[#allocation2 + $0x38] sm:$0xff]
          %v590 = vld [vmem:[#allocation2 + $0x40] sm:$0xff]
          %v591 = vld [vmem:[#allocation2 + $0x48] sm:$0xff]
          %v592 = vld [vmem:[#allocation2 + $0x50] sm:$0xff]
          %v593 = vld [vmem:[#allocation2 + $0x58] sm:$0xff]
          %v594 = vld [vmem:[#allocation2 + $0x60] sm:$0xff]
          %v595 = vld [vmem:[#allocation2 + $0x68] sm:$0xff]
          %v596 = vld [vmem:[#allocation2 + $0x70] sm:$0xff]
          %v597 = vld [vmem:[#allocation2 + $0x78] sm:$0xff]
          %v598 = vld [vmem:[%s267] sm:$0x1]
          %v600 = vlaneseq
          %v601 = vshrl.u32 %v600, 7
          %v602 = vsub.s32 0, %v601
          %v603 = vrot.slane %v598, %v602
          %v605 = vadd.f32 %v582, %v603
          %v606 = vadd.f32 %v583, %v603
          %v607 = vadd.f32 %v584, %v603
          %v608 = vadd.f32 %v585, %v603
          %v609 = vadd.f32 %v586, %v603
          %v610 = vadd.f32 %v587, %v603
          %v611 = vadd.f32 %v588, %v603
          %v612 = vadd.f32 %v589, %v603
          %v613 = vadd.f32 %v590, %v603
          %v614 = vadd.f32 %v591, %v603
          %v615 = vadd.f32 %v592, %v603
          %v616 = vadd.f32 %v593, %v603
          %v617 = vadd.f32 %v594, %v603
          %v618 = vadd.f32 %v595, %v603
          %v619 = vadd.f32 %v596, %v603
          %v620 = vadd.f32 %v597, %v603
          %621 = vst [vmem:[%s262] sm:$0xff] %v605
          %622 = vst [vmem:[%s262 + $0x8] sm:$0xff] %v606
          %623 = vst [vmem:[%s262 + $0x10] sm:$0xff] %v607
          %624 = vst [vmem:[%s262 + $0x18] sm:$0xff] %v608
          %625 = vst [vmem:[%s262 + $0x20] sm:$0xff] %v609
          %626 = vst [vmem:[%s262 + $0x28] sm:$0xff] %v610
          %627 = vst [vmem:[%s262 + $0x30] sm:$0xff] %v611
          %628 = vst [vmem:[%s262 + $0x38] sm:$0xff] %v612
          %629 = vst [vmem:[%s262 + $0x40] sm:$0xff] %v613
          %630 = vst [vmem:[%s262 + $0x48] sm:$0xff] %v614
          %631 = vst [vmem:[%s262 + $0x50] sm:$0xff] %v615
          %632 = vst [vmem:[%s262 + $0x58] sm:$0xff] %v616
          %633 = vst [vmem:[%s262 + $0x60] sm:$0xff] %v617
          %634 = vst [vmem:[%s262 + $0x68] sm:$0xff] %v618
          %635 = vst [vmem:[%s262 + $0x70] sm:$0xff] %v619
          %636 = vst [vmem:[%s262 + $0x78] sm:$0xff] %v620
        $region48: #{tpu_custom_call.1} parent=31 // pred_fallthru
          _
        %s637 = sand.u32 %s143, 1
        %s638 = scalar_lea.sflag [#allocation5], %s637
        %s639 = sand.u32 %s143, 1
        %s640 = smul.addr %s639, 128
        %s641 = scalar_lea.vmem [#allocation8], %s640
        // Predicated region
        $region49: #{tpu_custom_call.1} parent=31 // pred_check
          %p642 = pneg %p153
        $region50: #{tpu_custom_call.1} parent=31 // pred_check_branch
          %644 = sbr.rel (%p642) target = $region52
        $region51: #{tpu_custom_call.1} parent=31 // pred_region
          %s645 = smul.u32 16, %s28
          %s647 = ssub.s32 2048, 2048
          %648 = vsyncadd %s638, %s647
          %s649 = sadd.s32 %s29, %s645
          %s650 = smul.addr %s27, 16
          %s651 = sadd.s32 %s649, %s650
          %s652 = smul.addr %s651, 128
          %s653 = scalar_lea.hbm %s3, %s652
          %s654 = sshll.u32 %s641, 4
          %s655 = int_to_ptr.vmem [resolvable:$true] %s654
          %660 = dma.vmem_to_hbm [thread:$0]  %s655, 2048, %s653, %s638, 128, 128, 8
        $region52: #{tpu_custom_call.1} parent=31 // pred_fallthru
          _
      $region32: #{tpu_custom_call.1} parent=5 // pred_fallthru
        _
      %p661 = scmp.le.s32.totalorder 2, %s16
      // Predicated region
      $region53: #{tpu_custom_call.1} parent=5 // pred_check
        %p662 = pneg %p661
      $region54: #{tpu_custom_call.1} parent=5 // pred_check_branch
        %664 = sbr.rel (%p662) target = $region56
      $region55: #{tpu_custom_call.1} parent=5 // pred_region
        %s665 = ssub.s32 %s16, 2
        // Predicated region
        $region57: #{tpu_custom_call.1} parent=55 // pred_check
          %p666 = pneg %p159
        $region58: #{tpu_custom_call.1} parent=55 // pred_check_branch
          %668 = sbr.rel (%p666) target = $region60
        $region59: #{tpu_custom_call.1} parent=55 // pred_region
          %s669 = sand.u32 %s144, 1
          %s670 = scalar_lea.sflag [#allocation5], %s669
          %s671 = sand.u32 %s144, 1
          %s672 = smul.addr %s671, 128
          %s673 = scalar_lea.vmem [#allocation8], %s672
          %674 = dma.done %s670, 2048
        $region60: #{tpu_custom_call.1} parent=55 // pred_fallthru
          _
      $region56: #{tpu_custom_call.1} parent=5 // pred_fallthru
        _
    $region6: #{tpu_custom_call.1} parent=1 // loop_footer
      %s20 = sadd.s32 1, %s16
    $region7: #{tpu_custom_call.1} parent=1 // loop_footer_branch
      %15 = sbr.rel target = $region3
    $region8: #{tpu_custom_call.1} parent=1 // loop_exit
      _
    %675 = vsyncpa [#allocation4], 1
    %s676 = scalar_lea.sflag [#allocation4], 1
    %677 = vsyncpa %s676, 1
    %678 = vsyncpa [#allocation7], 1
    %679 = vsyncpa [#allocation5], 1
    %s680 = scalar_lea.sflag [#allocation5], 1
    %681 = vsyncpa %s680, 1

</llo_original>
